<compile_context>
chip_gen: v5e
topology: v5e:2x2
jax: 0.10.0
libtpu: 0.0.40
codegen_flags: <defaults>
</compile_context>

<pallas_src>
import functools

import jax
import jax.numpy as jnp
from jax.experimental import pallas as pl
from jax.experimental.pallas import tpu as pltpu


def _folding_kernel(compute_dtype, first_relu, layer_descs,
                    g_ref, wg_ref, cb1_ref, *refs):
    """refs = [(W_T, bias) per layer ..., out_ref].

    g_ref   : (1, G, tile_n) f32   folding-grid tile, points on lanes
    wg_ref  : (H0, G)        f32   first-layer grid weight (transposed)
    cb1_ref : (1, H0, 1)     f32   per-batch (cw @ W1_0c + b1_0) column
    W_T     : (H_out, H_in)        layer weight (transposed, compute dtype)
    bias    : (H_out, 1) static or (1, H_out, 1) per-batch, f32
    out_ref : (1, out_dim, tile_n) f32
    """
    f32 = jnp.float32
    out_ref = refs[-1]
    params = refs[:-1]

    g = g_ref[0]                      # (G, tile_n)  f32
    wg = wg_ref[...]                  # (H0, G)      f32
    n_g = wg.shape[1]

    # First layer: K = G (tiny) -> VPU broadcast FMAs; MXU/vex slot stays free.
    x = wg[:, 0:1] * g[0:1, :] + cb1_ref[0]
    for k in range(1, n_g):
        x = x + wg[:, k:k + 1] * g[k:k + 1, :]
    if first_relu:                    # doLastRelu=False semantics
        x = jnp.maximum(x, 0.0)

    idx = 0
    for per_batch, relu in layer_descs:
        w_ref, b_ref = params[idx], params[idx + 1]
        idx += 2
        b = b_ref[0] if per_batch else b_ref[...]
        xc = x if compute_dtype == f32 else x.astype(compute_dtype)
        x = jnp.dot(w_ref[...], xc, preferred_element_type=f32) + b
        if relu:
            x = jnp.maximum(x, 0.0)

    out_ref[...] = x[None, :, :].astype(out_ref.dtype)


def _round_up(x, m):
    return (x + m - 1) // m * m


def folding_net_vanilla(cw, grid_pts, fold1_params, fold2_params, *,
                        tile_n=2048, compute_dtype=jnp.float32):
    """cw: (B, Ccw) f32, grid_pts: (B, N, G) f32 -> (B, N, out_dim) f32."""
    B, N, G = grid_pts.shape
    n_fold1 = len(fold1_params)
    n_fold2 = len(fold2_params)
    assert n_fold1 >= 1
    f32 = jnp.float32

    # ---- tile / padding: points are the lane axis -> multiples of 128 ----
    n128 = _round_up(N, 128)
    tile_n = _round_up(min(tile_n, n128), 128)
    if B == 1 and tile_n >= n128 and n128 >= 256:
        tile_n = _round_up((n128 + 1) // 2, 128)   # keep >= 2 grid steps (v7x)
    n_pad = _round_up(N, tile_n)
    num_tiles = n_pad // tile_n

    grid_t = jnp.transpose(
        jnp.pad(grid_pts.astype(f32), ((0, 0), (0, n_pad - N), (0, 0))),
        (0, 2, 1))                                            # (B, G, n_pad)
    cw = cw.astype(f32)

    # ---- first (grid) layer: split weight + hoisted codeword projection ----
    w0, b0 = fold1_params[0]
    H0 = w0.shape[1]
    wg_t = jnp.asarray(w0[:G].T, f32)                         # (H0, G)
    cb1 = (cw @ w0[G:] + b0)[:, :, None].astype(f32)          # (B, H0, 1)
    first_relu = n_fold1 > 1

    # ---- remaining layers: (W_T, bias, per_batch_bias, relu) ----
    layers = []
    if n_fold2 > 0:
        w20, b20 = fold2_params[0]
        if n_fold1 >= 2:
            for (w, b) in fold1_params[1:-1]:                 # inner fold1 (ReLU)
                layers.append((w.T, b.reshape(-1, 1), False, True))
            # Fuse fold1's ReLU-free last linear into fold2's first linear.
            w1l, b1l = fold1_params[-1]
            d1 = w1l.shape[1]
            w2x, w2c = w20[:d1], w20[d1:]
            w_fuse = w1l.astype(f32) @ w2x.astype(f32)
            cb2 = cw @ w2c + b1l @ w2x + b20                  # (B, H2_0)
            layers.append((w_fuse.T, cb2[:, :, None], True, n_fold2 > 1))
        else:
            d1 = fold1_params[0][0].shape[1]
            w2x, w2c = w20[:d1], w20[d1:]
            cb2 = cw @ w2c + b20
            layers.append((w2x.T, cb2[:, :, None], True, n_fold2 > 1))
        for li, (w, b) in enumerate(fold2_params[1:], start=1):
            layers.append((w.T, b.reshape(-1, 1), False, li != n_fold2 - 1))
    else:
        for li, (w, b) in enumerate(fold1_params[1:], start=1):
            layers.append((w.T, b.reshape(-1, 1), False, li != n_fold1 - 1))

    out_dim = layers[-1][0].shape[0] if layers else H0
    layer_descs = tuple((pb, relu) for (_, _, pb, relu) in layers)

    # ---- operands + BlockSpecs ----
    operands = [grid_t, wg_t, cb1]
    in_specs = [
        pl.BlockSpec((1, G, tile_n), lambda b, n: (b, 0, n)),   # grid tile
        pl.BlockSpec(wg_t.shape, lambda b, n: (0, 0)),          # resident weight
        pl.BlockSpec((1, H0, 1), lambda b, n: (b, 0, 0)),       # per-batch column
    ]
    for (w_t, bias, per_batch, _) in layers:
        w_arr = jnp.asarray(w_t, compute_dtype)
        operands.append(w_arr)
        in_specs.append(pl.BlockSpec(w_arr.shape, lambda b, n: (0, 0)))
        b_arr = jnp.asarray(bias, f32)
        operands.append(b_arr)
        if per_batch:
            in_specs.append(
                pl.BlockSpec((1,) + b_arr.shape[1:], lambda b, n: (b, 0, 0)))
        else:
            in_specs.append(pl.BlockSpec(b_arr.shape, lambda b, n: (0, 0)))

    out_spec = pl.BlockSpec((1, out_dim, tile_n), lambda b, n: (b, 0, n))

    kernel = functools.partial(_folding_kernel, compute_dtype, first_relu,
                               layer_descs)

    out_t = pl.pallas_call(
        kernel,
        out_shape=jax.ShapeDtypeStruct((B, out_dim, n_pad), jnp.float32),
        grid_spec=pltpu.PrefetchScalarGridSpec(
            num_scalar_prefetch=0,
            grid=(B, num_tiles),
            in_specs=in_specs,
            out_specs=out_spec,
        ),
        compiler_params=pltpu.CompilerParams(
            dimension_semantics=("parallel", "parallel")),
    )(*operands)

    # Back to the module's (B, N, out_dim) layout.
    return jnp.transpose(out_t, (0, 2, 1))[:, :N, :]


def init_pointwise_mlp(key, dims):
    """Deterministic nn.Linear-style init; weights stored as (D_in, D_out)."""
    params = []
    for i in range(len(dims) - 1):
        key, k1, k2 = jax.random.split(key, 3)
        bound = 1.0 / float(dims[i]) ** 0.5
        w = jax.random.uniform(k1, (dims[i], dims[i + 1]), jnp.float32,
                               minval=-bound, maxval=bound)
        b = jax.random.uniform(k2, (1, dims[i + 1]), jnp.float32,
                               minval=-bound, maxval=bound)
        params.append((w, b))
    return params, key


def reference_forward(cw, grid_pts, fold1_params, fold2_params):
    """Pure-JAX reference mirroring the PyTorch forward."""
    B, N, _ = grid_pts.shape
    cw_exp = jnp.broadcast_to(cw[:, None, :], (B, N, cw.shape[1]))
    x = jnp.concatenate([grid_pts, cw_exp], axis=2)
    for li, (w, b) in enumerate(fold1_params):
        x = x @ w + b
        if li != len(fold1_params) - 1:
            x = jnp.maximum(x, 0.0)
    if fold2_params:
        x = jnp.concatenate([x, cw_exp], axis=2)
        for li, (w, b) in enumerate(fold2_params):
            x = x @ w + b
            if li != len(fold2_params) - 1:
                x = jnp.maximum(x, 0.0)
    return x


if __name__ == "__main__":
    key = jax.random.PRNGKey(0)

    # Small shapes consistent with the module; N deliberately not a multiple
    # of 128 to exercise the lane-axis padding path.
    B, N, G, Ccw, H = 2, 100, 2, 32, 32
    folding1_dims = [G + Ccw, H, H, 3]      # input = grid ++ codeword
    folding2_dims = [3 + Ccw, H, H, 3]      # input = fold1 output ++ codeword

    fold1_params, key = init_pointwise_mlp(key, folding1_dims)
    fold2_params, key = init_pointwise_mlp(key, folding2_dims)

    key, kc, kg = jax.random.split(key, 3)
    cw = jax.random.normal(kc, (B, Ccw), jnp.float32)            # codeword
    grid_pts = jax.random.normal(kg, (B, N, G), jnp.float32)     # 2-D folding grid

    ref = reference_forward(cw, grid_pts, fold1_params, fold2_params)

    # Default path: f32 compute (exact up to re-association).
    out = folding_net_vanilla(cw, grid_pts, fold1_params, fold2_params)
    out = jax.block_until_ready(out)
    assert out.shape == (B, N, 3), out.shape
    assert jnp.allclose(out, ref, atol=1e-3, rtol=1e-3), "f32 mismatch vs reference"

    # Fast path for v6e/v7x: bf16 matmul weights/activations (grid + first
    # layer stay f32), f32 accumulation.
    out_bf16 = folding_net_vanilla(cw, grid_pts, fold1_params, fold2_params,
                                   compute_dtype=jnp.bfloat16)
    out_bf16 = jax.block_until_ready(out_bf16)
    assert jnp.allclose(out_bf16, ref, atol=1e-1, rtol=1e-1), "bf16 mismatch vs reference"

    print("KERNEL_OK")
</pallas_src>

<mosaic_0001>
module attributes {stable_mosaic.version = 11 : i64} {
  func.func @_folding_kernel(%arg0: i32, %arg1: i32, %arg2: memref<1x2x128xf32, #tpu.memory_space<vmem>>, %arg3: memref<32x2xf32, #tpu.memory_space<vmem>>, %arg4: memref<1x32x1xf32, #tpu.memory_space<vmem>>, %arg5: memref<32x32xf32, #tpu.memory_space<vmem>>, %arg6: memref<32x1xf32, #tpu.memory_space<vmem>>, %arg7: memref<32x32xf32, #tpu.memory_space<vmem>>, %arg8: memref<1x32x1xf32, #tpu.memory_space<vmem>>, %arg9: memref<32x32xf32, #tpu.memory_space<vmem>>, %arg10: memref<32x1xf32, #tpu.memory_space<vmem>>, %arg11: memref<3x32xf32, #tpu.memory_space<vmem>>, %arg12: memref<3x1xf32, #tpu.memory_space<vmem>>, %arg13: memref<1x3x128xf32, #tpu.memory_space<vmem>>) attributes {dimension_semantics = [#tpu.dimension_semantics<parallel>, #tpu.dimension_semantics<parallel>], iteration_bounds = array<i64: 2, 1>, scalar_prefetch = 0 : i64, scratch_operands = 0 : i64, tpu.core_type = #tpu.core_type<tc>, window_params = [{transform_indices = @transform_0, window_bounds = array<i64: 1, 2, 128>}, {pipeline_mode = #tpu.pipeline_mode<synchronous>, transform_indices = @transform_1, window_bounds = array<i64: 32, 2>}, {transform_indices = @transform_2, window_bounds = array<i64: 1, 32, 1>}, {pipeline_mode = #tpu.pipeline_mode<synchronous>, transform_indices = @transform_3, window_bounds = array<i64: 32, 32>}, {pipeline_mode = #tpu.pipeline_mode<synchronous>, transform_indices = @transform_4, window_bounds = array<i64: 32, 1>}, {pipeline_mode = #tpu.pipeline_mode<synchronous>, transform_indices = @transform_5, window_bounds = array<i64: 32, 32>}, {transform_indices = @transform_6, window_bounds = array<i64: 1, 32, 1>}, {pipeline_mode = #tpu.pipeline_mode<synchronous>, transform_indices = @transform_7, window_bounds = array<i64: 32, 32>}, {pipeline_mode = #tpu.pipeline_mode<synchronous>, transform_indices = @transform_8, window_bounds = array<i64: 32, 1>}, {pipeline_mode = #tpu.pipeline_mode<synchronous>, transform_indices = @transform_9, window_bounds = array<i64: 3, 32>}, {pipeline_mode = #tpu.pipeline_mode<synchronous>, transform_indices = @transform_10, window_bounds = array<i64: 3, 1>}, {transform_indices = @transform_11, window_bounds = array<i64: 1, 3, 128>}]} {
    %c0 = arith.constant 0 : index
    %c0_0 = arith.constant 0 : index
    %c0_1 = arith.constant 0 : index
    %0 = vector.load %arg2[%c0, %c0_0, %c0_1] : memref<1x2x128xf32, #tpu.memory_space<vmem>>, vector<1x2x128xf32>
    %1 = vector.shape_cast %0 : vector<1x2x128xf32> to vector<2x128xf32>
    %c0_2 = arith.constant 0 : index
    %c0_3 = arith.constant 0 : index
    %2 = vector.load %arg3[%c0_2, %c0_3] : memref<32x2xf32, #tpu.memory_space<vmem>>, vector<32x2xf32>
    %3 = vector.extract_strided_slice %2 {offsets = [0, 0], sizes = [32, 1], strides = [1, 1]} : vector<32x2xf32> to vector<32x1xf32>
    %4 = vector.extract_strided_slice %1 {offsets = [0, 0], sizes = [1, 128], strides = [1, 1]} : vector<2x128xf32> to vector<1x128xf32>
    %5 = vector.broadcast %3 : vector<32x1xf32> to vector<32x128xf32>
    %6 = vector.broadcast %4 : vector<1x128xf32> to vector<32x128xf32>
    %7 = arith.mulf %5, %6 : vector<32x128xf32>
    %c0_4 = arith.constant 0 : index
    %c0_5 = arith.constant 0 : index
    %c0_6 = arith.constant 0 : index
    %8 = vector.load %arg4[%c0_4, %c0_5, %c0_6] : memref<1x32x1xf32, #tpu.memory_space<vmem>>, vector<1x32x1xf32>
    %9 = vector.shape_cast %8 : vector<1x32x1xf32> to vector<32x1xf32>
    %10 = vector.broadcast %9 : vector<32x1xf32> to vector<32x128xf32>
    %11 = arith.addf %7, %10 : vector<32x128xf32>
    %12 = vector.extract_strided_slice %2 {offsets = [0, 1], sizes = [32, 1], strides = [1, 1]} : vector<32x2xf32> to vector<32x1xf32>
    %13 = vector.extract_strided_slice %1 {offsets = [1, 0], sizes = [1, 128], strides = [1, 1]} : vector<2x128xf32> to vector<1x128xf32>
    %14 = vector.broadcast %12 : vector<32x1xf32> to vector<32x128xf32>
    %15 = vector.broadcast %13 : vector<1x128xf32> to vector<32x128xf32>
    %16 = arith.mulf %14, %15 : vector<32x128xf32>
    %17 = arith.addf %11, %16 : vector<32x128xf32>
    %cst = arith.constant 0.000000e+00 : f32
    %18 = vector.broadcast %cst : f32 to vector<32x128xf32>
    %19 = arith.maximumf %17, %18 : vector<32x128xf32>
    %c0_7 = arith.constant 0 : index
    %c0_8 = arith.constant 0 : index
    %20 = vector.load %arg6[%c0_7, %c0_8] : memref<32x1xf32, #tpu.memory_space<vmem>>, vector<32x1xf32>
    %c0_9 = arith.constant 0 : index
    %c0_10 = arith.constant 0 : index
    %21 = vector.load %arg5[%c0_9, %c0_10] : memref<32x32xf32, #tpu.memory_space<vmem>>, vector<32x32xf32>
    %cst_11 = arith.constant dense<0.000000e+00> : vector<32x128xf32>
    %22 = tpu.matmul %21, %19, %cst_11 {dimension_numbers = #tpu.dot_dimension_numbers<[1], [0], [0], [1], [0, 0, 1, 1], [], []>} : vector<32x32xf32>, vector<32x128xf32>, vector<32x128xf32> -> vector<32x128xf32>
    %23 = vector.broadcast %20 : vector<32x1xf32> to vector<32x128xf32>
    %24 = arith.addf %22, %23 : vector<32x128xf32>
    %cst_12 = arith.constant 0.000000e+00 : f32
    %25 = vector.broadcast %cst_12 : f32 to vector<32x128xf32>
    %26 = arith.maximumf %24, %25 : vector<32x128xf32>
    %c0_13 = arith.constant 0 : index
    %c0_14 = arith.constant 0 : index
    %c0_15 = arith.constant 0 : index
    %27 = vector.load %arg8[%c0_13, %c0_14, %c0_15] : memref<1x32x1xf32, #tpu.memory_space<vmem>>, vector<1x32x1xf32>
    %28 = vector.shape_cast %27 : vector<1x32x1xf32> to vector<32x1xf32>
    %c0_16 = arith.constant 0 : index
    %c0_17 = arith.constant 0 : index
    %29 = vector.load %arg7[%c0_16, %c0_17] : memref<32x32xf32, #tpu.memory_space<vmem>>, vector<32x32xf32>
    %cst_18 = arith.constant dense<0.000000e+00> : vector<32x128xf32>
    %30 = tpu.matmul %29, %26, %cst_18 {dimension_numbers = #tpu.dot_dimension_numbers<[1], [0], [0], [1], [0, 0, 1, 1], [], []>} : vector<32x32xf32>, vector<32x128xf32>, vector<32x128xf32> -> vector<32x128xf32>
    %31 = vector.broadcast %28 : vector<32x1xf32> to vector<32x128xf32>
    %32 = arith.addf %30, %31 : vector<32x128xf32>
    %cst_19 = arith.constant 0.000000e+00 : f32
    %33 = vector.broadcast %cst_19 : f32 to vector<32x128xf32>
    %34 = arith.maximumf %32, %33 : vector<32x128xf32>
    %c0_20 = arith.constant 0 : index
    %c0_21 = arith.constant 0 : index
    %35 = vector.load %arg10[%c0_20, %c0_21] : memref<32x1xf32, #tpu.memory_space<vmem>>, vector<32x1xf32>
    %c0_22 = arith.constant 0 : index
    %c0_23 = arith.constant 0 : index
    %36 = vector.load %arg9[%c0_22, %c0_23] : memref<32x32xf32, #tpu.memory_space<vmem>>, vector<32x32xf32>
    %cst_24 = arith.constant dense<0.000000e+00> : vector<32x128xf32>
    %37 = tpu.matmul %36, %34, %cst_24 {dimension_numbers = #tpu.dot_dimension_numbers<[1], [0], [0], [1], [0, 0, 1, 1], [], []>} : vector<32x32xf32>, vector<32x128xf32>, vector<32x128xf32> -> vector<32x128xf32>
    %38 = vector.broadcast %35 : vector<32x1xf32> to vector<32x128xf32>
    %39 = arith.addf %37, %38 : vector<32x128xf32>
    %cst_25 = arith.constant 0.000000e+00 : f32
    %40 = vector.broadcast %cst_25 : f32 to vector<32x128xf32>
    %41 = arith.maximumf %39, %40 : vector<32x128xf32>
    %c0_26 = arith.constant 0 : index
    %c0_27 = arith.constant 0 : index
    %42 = vector.load %arg12[%c0_26, %c0_27] : memref<3x1xf32, #tpu.memory_space<vmem>>, vector<3x1xf32>
    %c0_28 = arith.constant 0 : index
    %c0_29 = arith.constant 0 : index
    %43 = vector.load %arg11[%c0_28, %c0_29] : memref<3x32xf32, #tpu.memory_space<vmem>>, vector<3x32xf32>
    %cst_30 = arith.constant dense<0.000000e+00> : vector<3x128xf32>
    %44 = tpu.matmul %43, %41, %cst_30 {dimension_numbers = #tpu.dot_dimension_numbers<[1], [0], [0], [1], [0, 0, 1, 1], [], []>} : vector<3x32xf32>, vector<32x128xf32>, vector<3x128xf32> -> vector<3x128xf32>
    %45 = vector.broadcast %42 : vector<3x1xf32> to vector<3x128xf32>
    %46 = arith.addf %44, %45 : vector<3x128xf32>
    %47 = vector.shape_cast %46 : vector<3x128xf32> to vector<1x3x128xf32>
    %c0_31 = arith.constant 0 : index
    %c0_32 = arith.constant 0 : index
    %c0_33 = arith.constant 0 : index
    %48 = vector.load %arg13[%c0_31, %c0_32, %c0_33] : memref<1x3x128xf32, #tpu.memory_space<vmem>>, vector<1x3x128xf32>
    tpu.vector_store %arg13[%c0_31, %c0_32, %c0_33], %47 {strides = array<i32>} : memref<1x3x128xf32, #tpu.memory_space<vmem>>, vector<1x3x128xf32>,
    return
  }
  func.func @transform_0(%arg0: i32, %arg1: i32) -> (i32, i32, i32) {
    %c0_i32 = arith.constant 0 : i32
    %c0_i32_0 = arith.constant 0 : i32
    return %arg0, %c0_i32, %arg1 : i32, i32, i32
  }
  func.func @transform_1(%arg0: i32, %arg1: i32) -> (i32, i32) {
    %c0_i32 = arith.constant 0 : i32
    %c0_i32_0 = arith.constant 0 : i32
    %c0_i32_1 = arith.constant 0 : i32
    return %c0_i32, %c0_i32_0 : i32, i32
  }
  func.func @transform_2(%arg0: i32, %arg1: i32) -> (i32, i32, i32) {
    %c0_i32 = arith.constant 0 : i32
    %c0_i32_0 = arith.constant 0 : i32
    %c0_i32_1 = arith.constant 0 : i32
    return %arg0, %c0_i32, %c0_i32_0 : i32, i32, i32
  }
  func.func @transform_3(%arg0: i32, %arg1: i32) -> (i32, i32) {
    %c0_i32 = arith.constant 0 : i32
    %c0_i32_0 = arith.constant 0 : i32
    %c0_i32_1 = arith.constant 0 : i32
    return %c0_i32, %c0_i32_0 : i32, i32
  }
  func.func @transform_4(%arg0: i32, %arg1: i32) -> (i32, i32) {
    %c0_i32 = arith.constant 0 : i32
    %c0_i32_0 = arith.constant 0 : i32
    %c0_i32_1 = arith.constant 0 : i32
    return %c0_i32, %c0_i32_0 : i32, i32
  }
  func.func @transform_5(%arg0: i32, %arg1: i32) -> (i32, i32) {
    %c0_i32 = arith.constant 0 : i32
    %c0_i32_0 = arith.constant 0 : i32
    %c0_i32_1 = arith.constant 0 : i32
    return %c0_i32, %c0_i32_0 : i32, i32
  }
  func.func @transform_6(%arg0: i32, %arg1: i32) -> (i32, i32, i32) {
    %c0_i32 = arith.constant 0 : i32
    %c0_i32_0 = arith.constant 0 : i32
    %c0_i32_1 = arith.constant 0 : i32
    return %arg0, %c0_i32, %c0_i32_0 : i32, i32, i32
  }
  func.func @transform_7(%arg0: i32, %arg1: i32) -> (i32, i32) {
    %c0_i32 = arith.constant 0 : i32
    %c0_i32_0 = arith.constant 0 : i32
    %c0_i32_1 = arith.constant 0 : i32
    return %c0_i32, %c0_i32_0 : i32, i32
  }
  func.func @transform_8(%arg0: i32, %arg1: i32) -> (i32, i32) {
    %c0_i32 = arith.constant 0 : i32
    %c0_i32_0 = arith.constant 0 : i32
    %c0_i32_1 = arith.constant 0 : i32
    return %c0_i32, %c0_i32_0 : i32, i32
  }
  func.func @transform_9(%arg0: i32, %arg1: i32) -> (i32, i32) {
    %c0_i32 = arith.constant 0 : i32
    %c0_i32_0 = arith.constant 0 : i32
    %c0_i32_1 = arith.constant 0 : i32
    return %c0_i32, %c0_i32_0 : i32, i32
  }
  func.func @transform_10(%arg0: i32, %arg1: i32) -> (i32, i32) {
    %c0_i32 = arith.constant 0 : i32
    %c0_i32_0 = arith.constant 0 : i32
    %c0_i32_1 = arith.constant 0 : i32
    return %c0_i32, %c0_i32_0 : i32, i32
  }
  func.func @transform_11(%arg0: i32, %arg1: i32) -> (i32, i32, i32) {
    %c0_i32 = arith.constant 0 : i32
    %c0_i32_0 = arith.constant 0 : i32
    return %arg0, %c0_i32, %arg1 : i32, i32, i32
  }
}

</mosaic_0001>

<llo_original>
// kernel: tpu_custom_call.1
$region0: #{tpu_custom_call.1}
  #allocation0 [shape = 'u32[]', space=smem, size = 0x4, offset = 0x4, fixed_abs, tag = 'smem constant byte address 0x4 - core index']
  #allocation1 [shape = 'u32[72,128]{1,0:T(1,128)}', space=vmem, size = 0x9000, scoped, tag = 'internal scratch']
  %s0 = inlined_call_operand.vmem [shape: f32[2,2,128], index: 0, kind: input, shape index: {}]
  %s1 = inlined_call_operand.vmem [shape: f32[32,2], index: 1, kind: input, shape index: {}]
  %s2 = inlined_call_operand.vmem [shape: f32[2,32,1], index: 2, kind: input, shape index: {}]
  %s3 = inlined_call_operand.vmem [shape: f32[32,32], index: 3, kind: input, shape index: {}]
  %s4 = inlined_call_operand.vmem [shape: f32[32,1], index: 4, kind: input, shape index: {}]
  %s5 = inlined_call_operand.vmem [shape: f32[32,32], index: 5, kind: input, shape index: {}]
  %s6 = inlined_call_operand.vmem [shape: f32[2,32,1], index: 6, kind: input, shape index: {}]
  %s7 = inlined_call_operand.vmem [shape: f32[32,32], index: 7, kind: input, shape index: {}]
  %s8 = inlined_call_operand.vmem [shape: f32[32,1], index: 8, kind: input, shape index: {}]
  %s9 = inlined_call_operand.vmem [shape: f32[3,32], index: 9, kind: input, shape index: {}]
  %s10 = inlined_call_operand.vmem [shape: f32[3,1], index: 10, kind: input, shape index: {}]
  %s11 = inlined_call_operand.vmem [shape: f32[2,3,128], index: 11, kind: output, shape index: {}]
  %s12 = sld [smem:[#allocation0]]
  $region77: #{tpu_custom_call.1} parent=0
    _
  %s14 = ssub.s32 1, %s12
  %s15 = scalar_select 0, %s14, %s12
  loop: start=0, step=1, limit=4
  $region2: #{tpu_custom_call.1} parent=0 // loop_pre_header
    _
  $region3: #{tpu_custom_call.1} parent=0 // loop_header
    %s17 = sphi 0, %s21
    %p18 = scmp.ge.s32.totalorder %s17, 4
    %s24 = sphi 0, %s36
    %s25 = sphi 0, %s32
    %s26 = sphi 0, %s24
    %s27 = sphi 0, %s25
    %s28 = sphi 0, %s26
    %s29 = sphi 0, %s27
    %s41 = sphi 0, %s43
    %s44 = sphi 0, %s41
    %s45 = sphi 0, %s44
    %s61 = sphi 0, %s45
    %s65 = sphi 0, %s65
    %s67 = sphi 0, %s65
    %s68 = sphi 0, %s67
    %s82 = sphi 0, %s68
    %s88 = sphi 0, %s90
    %s91 = sphi 0, %s88
    %s92 = sphi 0, %s91
    %s108 = sphi 0, %s92
    %s112 = sphi 0, %s112
    %s114 = sphi 0, %s112
    %s115 = sphi 0, %s114
    %s129 = sphi 0, %s115
    %s133 = sphi 0, %s133
    %s135 = sphi 0, %s133
    %s136 = sphi 0, %s135
    %s150 = sphi 0, %s136
    %s154 = sphi 0, %s154
    %s156 = sphi 0, %s154
    %s157 = sphi 0, %s156
    %s171 = sphi 0, %s157
    %s177 = sphi 0, %s179
    %s180 = sphi 0, %s177
    %s181 = sphi 0, %s180
    %s197 = sphi 0, %s181
    %s201 = sphi 0, %s201
    %s203 = sphi 0, %s201
    %s204 = sphi 0, %s203
    %s218 = sphi 0, %s204
    %s222 = sphi 0, %s222
    %s224 = sphi 0, %s222
    %s225 = sphi 0, %s224
    %s239 = sphi 0, %s225
    %s243 = sphi 0, %s243
    %s245 = sphi 0, %s243
    %s246 = sphi 0, %s245
    %s260 = sphi 0, %s246
    %s264 = sphi 0, %s264
    %s266 = sphi 0, %s264
    %s267 = sphi 0, %s266
    %s281 = sphi 0, %s267
    %s289 = sphi 0, %s291
    %s292 = sphi 0, %s289
    %s293 = sphi 0, %s292
    %s309 = sphi 0, %s293
  $region4: #{tpu_custom_call.1} parent=0 // loop_header_branch
    %20 = sbr.rel (%p18) target = $region8
  $region5: #{tpu_custom_call.1} parent=0 // loop_body
    %s22 = ssub.s32 %s17, 1
    %s23 = ssub.s32 %s17, 2
    %s30 = sadd.s32 1, %s25
    %p31 = scmp.ge.s32.totalorder %s30, 1
    %s32 = scalar_select %p31, 0, %s30
    %s33 = sadd.s32 1, %s24
    %s34 = scalar_select %p31, %s33, %s24
    %p35 = scmp.ge.s32.totalorder %s34, 2
    %s36 = scalar_select %p35, 0, %s34
    %s37 = ssub.s32 %s24, %s36
    %s38 = ssub.s32 %s25, %s32
    %s39 = sor.u32 %s37, %s38
    %p40 = scmp.eq.s32.totalorder %s39, 0
    %s42 = sadd.s32 %s41, 1
    %s43 = scalar_select %p40, %s41, %s42
    %p46 = pneg %p40
    %p47 = scmp.eq.s32.totalorder %s17, 1
    %p48 = por %p46, %p47
    %p49 = scmp.ne.s32.totalorder %s41, %s44
    %p50 = scmp.eq.s32.totalorder %s17, 0
    %p51 = por %p49, %p50
    %p52 = scmp.ne.s32.totalorder %s41, %s44
    %p53 = scmp.eq.s32.totalorder %s22, 1
    %p54 = por %p52, %p53
    %p55 = scmp.ne.s32.totalorder %s44, %s45
    %p56 = scmp.eq.s32.totalorder %s22, 0
    %p57 = por %p55, %p56
    %p58 = scmp.ne.s32.totalorder %s44, %s45
    %p59 = scmp.eq.s32.totalorder %s23, 1
    %p60 = por %p58, %p59
    %p62 = scmp.ne.s32.totalorder %s45, %s61
    %p63 = scmp.eq.s32.totalorder %s23, 0
    %p64 = por %p62, %p63
    %s66 = sadd.s32 %s65, 1
    %p69 = scmp.eq.s32.totalorder %s17, 1
    %p70 = scmp.ne.s32.totalorder %s65, %s67
    %p71 = scmp.eq.s32.totalorder %s17, 0
    %p72 = por %p70, %p71
    %p73 = scmp.ne.s32.totalorder %s65, %s67
    %p74 = scmp.eq.s32.totalorder %s22, 1
    %p75 = por %p73, %p74
    %p76 = scmp.ne.s32.totalorder %s67, %s68
    %p77 = scmp.eq.s32.totalorder %s22, 0
    %p78 = por %p76, %p77
    %p79 = scmp.ne.s32.totalorder %s67, %s68
    %p80 = scmp.eq.s32.totalorder %s23, 1
    %p81 = por %p79, %p80
    %p83 = scmp.ne.s32.totalorder %s68, %s82
    %p84 = scmp.eq.s32.totalorder %s23, 0
    %p85 = por %p83, %p84
    %s86 = ssub.s32 %s24, %s36
    %p87 = scmp.eq.s32.totalorder %s86, 0
    %s89 = sadd.s32 %s88, 1
    %s90 = scalar_select %p87, %s88, %s89
    %p93 = pneg %p87
    %p94 = scmp.eq.s32.totalorder %s17, 1
    %p95 = por %p93, %p94
    %p96 = scmp.ne.s32.totalorder %s88, %s91
    %p97 = scmp.eq.s32.totalorder %s17, 0
    %p98 = por %p96, %p97
    %p99 = scmp.ne.s32.totalorder %s88, %s91
    %p100 = scmp.eq.s32.totalorder %s22, 1
    %p101 = por %p99, %p100
    %p102 = scmp.ne.s32.totalorder %s91, %s92
    %p103 = scmp.eq.s32.totalorder %s22, 0
    %p104 = por %p102, %p103
    %p105 = scmp.ne.s32.totalorder %s91, %s92
    %p106 = scmp.eq.s32.totalorder %s23, 1
    %p107 = por %p105, %p106
    %p109 = scmp.ne.s32.totalorder %s92, %s108
    %p110 = scmp.eq.s32.totalorder %s23, 0
    %p111 = por %p109, %p110
    %s113 = sadd.s32 %s112, 1
    %p116 = scmp.eq.s32.totalorder %s17, 1
    %p117 = scmp.ne.s32.totalorder %s112, %s114
    %p118 = scmp.eq.s32.totalorder %s17, 0
    %p119 = por %p117, %p118
    %p120 = scmp.ne.s32.totalorder %s112, %s114
    %p121 = scmp.eq.s32.totalorder %s22, 1
    %p122 = por %p120, %p121
    %p123 = scmp.ne.s32.totalorder %s114, %s115
    %p124 = scmp.eq.s32.totalorder %s22, 0
    %p125 = por %p123, %p124
    %p126 = scmp.ne.s32.totalorder %s114, %s115
    %p127 = scmp.eq.s32.totalorder %s23, 1
    %p128 = por %p126, %p127
    %p130 = scmp.ne.s32.totalorder %s115, %s129
    %p131 = scmp.eq.s32.totalorder %s23, 0
    %p132 = por %p130, %p131
    %s134 = sadd.s32 %s133, 1
    %p137 = scmp.eq.s32.totalorder %s17, 1
    %p138 = scmp.ne.s32.totalorder %s133, %s135
    %p139 = scmp.eq.s32.totalorder %s17, 0
    %p140 = por %p138, %p139
    %p141 = scmp.ne.s32.totalorder %s133, %s135
    %p142 = scmp.eq.s32.totalorder %s22, 1
    %p143 = por %p141, %p142
    %p144 = scmp.ne.s32.totalorder %s135, %s136
    %p145 = scmp.eq.s32.totalorder %s22, 0
    %p146 = por %p144, %p145
    %p147 = scmp.ne.s32.totalorder %s135, %s136
    %p148 = scmp.eq.s32.totalorder %s23, 1
    %p149 = por %p147, %p148
    %p151 = scmp.ne.s32.totalorder %s136, %s150
    %p152 = scmp.eq.s32.totalorder %s23, 0
    %p153 = por %p151, %p152
    %s155 = sadd.s32 %s154, 1
    %p158 = scmp.eq.s32.totalorder %s17, 1
    %p159 = scmp.ne.s32.totalorder %s154, %s156
    %p160 = scmp.eq.s32.totalorder %s17, 0
    %p161 = por %p159, %p160
    %p162 = scmp.ne.s32.totalorder %s154, %s156
    %p163 = scmp.eq.s32.totalorder %s22, 1
    %p164 = por %p162, %p163
    %p165 = scmp.ne.s32.totalorder %s156, %s157
    %p166 = scmp.eq.s32.totalorder %s22, 0
    %p167 = por %p165, %p166
    %p168 = scmp.ne.s32.totalorder %s156, %s157
    %p169 = scmp.eq.s32.totalorder %s23, 1
    %p170 = por %p168, %p169
    %p172 = scmp.ne.s32.totalorder %s157, %s171
    %p173 = scmp.eq.s32.totalorder %s23, 0
    %p174 = por %p172, %p173
    %s175 = ssub.s32 %s24, %s36
    %p176 = scmp.eq.s32.totalorder %s175, 0
    %s178 = sadd.s32 %s177, 1
    %s179 = scalar_select %p176, %s177, %s178
    %p182 = pneg %p176
    %p183 = scmp.eq.s32.totalorder %s17, 1
    %p184 = por %p182, %p183
    %p185 = scmp.ne.s32.totalorder %s177, %s180
    %p186 = scmp.eq.s32.totalorder %s17, 0
    %p187 = por %p185, %p186
    %p188 = scmp.ne.s32.totalorder %s177, %s180
    %p189 = scmp.eq.s32.totalorder %s22, 1
    %p190 = por %p188, %p189
    %p191 = scmp.ne.s32.totalorder %s180, %s181
    %p192 = scmp.eq.s32.totalorder %s22, 0
    %p193 = por %p191, %p192
    %p194 = scmp.ne.s32.totalorder %s180, %s181
    %p195 = scmp.eq.s32.totalorder %s23, 1
    %p196 = por %p194, %p195
    %p198 = scmp.ne.s32.totalorder %s181, %s197
    %p199 = scmp.eq.s32.totalorder %s23, 0
    %p200 = por %p198, %p199
    %s202 = sadd.s32 %s201, 1
    %p205 = scmp.eq.s32.totalorder %s17, 1
    %p206 = scmp.ne.s32.totalorder %s201, %s203
    %p207 = scmp.eq.s32.totalorder %s17, 0
    %p208 = por %p206, %p207
    %p209 = scmp.ne.s32.totalorder %s201, %s203
    %p210 = scmp.eq.s32.totalorder %s22, 1
    %p211 = por %p209, %p210
    %p212 = scmp.ne.s32.totalorder %s203, %s204
    %p213 = scmp.eq.s32.totalorder %s22, 0
    %p214 = por %p212, %p213
    %p215 = scmp.ne.s32.totalorder %s203, %s204
    %p216 = scmp.eq.s32.totalorder %s23, 1
    %p217 = por %p215, %p216
    %p219 = scmp.ne.s32.totalorder %s204, %s218
    %p220 = scmp.eq.s32.totalorder %s23, 0
    %p221 = por %p219, %p220
    %s223 = sadd.s32 %s222, 1
    %p226 = scmp.eq.s32.totalorder %s17, 1
    %p227 = scmp.ne.s32.totalorder %s222, %s224
    %p228 = scmp.eq.s32.totalorder %s17, 0
    %p229 = por %p227, %p228
    %p230 = scmp.ne.s32.totalorder %s222, %s224
    %p231 = scmp.eq.s32.totalorder %s22, 1
    %p232 = por %p230, %p231
    %p233 = scmp.ne.s32.totalorder %s224, %s225
    %p234 = scmp.eq.s32.totalorder %s22, 0
    %p235 = por %p233, %p234
    %p236 = scmp.ne.s32.totalorder %s224, %s225
    %p237 = scmp.eq.s32.totalorder %s23, 1
    %p238 = por %p236, %p237
    %p240 = scmp.ne.s32.totalorder %s225, %s239
    %p241 = scmp.eq.s32.totalorder %s23, 0
    %p242 = por %p240, %p241
    %s244 = sadd.s32 %s243, 1
    %p247 = scmp.eq.s32.totalorder %s17, 1
    %p248 = scmp.ne.s32.totalorder %s243, %s245
    %p249 = scmp.eq.s32.totalorder %s17, 0
    %p250 = por %p248, %p249
    %p251 = scmp.ne.s32.totalorder %s243, %s245
    %p252 = scmp.eq.s32.totalorder %s22, 1
    %p253 = por %p251, %p252
    %p254 = scmp.ne.s32.totalorder %s245, %s246
    %p255 = scmp.eq.s32.totalorder %s22, 0
    %p256 = por %p254, %p255
    %p257 = scmp.ne.s32.totalorder %s245, %s246
    %p258 = scmp.eq.s32.totalorder %s23, 1
    %p259 = por %p257, %p258
    %p261 = scmp.ne.s32.totalorder %s246, %s260
    %p262 = scmp.eq.s32.totalorder %s23, 0
    %p263 = por %p261, %p262
    %s265 = sadd.s32 %s264, 1
    %p268 = scmp.eq.s32.totalorder %s17, 1
    %p269 = scmp.ne.s32.totalorder %s264, %s266
    %p270 = scmp.eq.s32.totalorder %s17, 0
    %p271 = por %p269, %p270
    %p272 = scmp.ne.s32.totalorder %s264, %s266
    %p273 = scmp.eq.s32.totalorder %s22, 1
    %p274 = por %p272, %p273
    %p275 = scmp.ne.s32.totalorder %s266, %s267
    %p276 = scmp.eq.s32.totalorder %s22, 0
    %p277 = por %p275, %p276
    %p278 = scmp.ne.s32.totalorder %s266, %s267
    %p279 = scmp.eq.s32.totalorder %s23, 1
    %p280 = por %p278, %p279
    %p282 = scmp.ne.s32.totalorder %s267, %s281
    %p283 = scmp.eq.s32.totalorder %s23, 0
    %p284 = por %p282, %p283
    %s285 = ssub.s32 %s24, %s36
    %s286 = ssub.s32 %s25, %s32
    %s287 = sor.u32 %s285, %s286
    %p288 = scmp.eq.s32.totalorder %s287, 0
    %s290 = sadd.s32 %s289, 1
    %s291 = scalar_select %p288, %s289, %s290
    %p294 = pneg %p288
    %p295 = scmp.eq.s32.totalorder %s17, 1
    %p296 = por %p294, %p295
    %p297 = scmp.ne.s32.totalorder %s289, %s292
    %p298 = scmp.eq.s32.totalorder %s17, 0
    %p299 = por %p297, %p298
    %p300 = scmp.ne.s32.totalorder %s289, %s292
    %p301 = scmp.eq.s32.totalorder %s22, 1
    %p302 = por %p300, %p301
    %p303 = scmp.ne.s32.totalorder %s292, %s293
    %p304 = scmp.eq.s32.totalorder %s22, 0
    %p305 = por %p303, %p304
    %p306 = scmp.ne.s32.totalorder %s292, %s293
    %p307 = scmp.eq.s32.totalorder %s23, 1
    %p308 = por %p306, %p307
    %p310 = scmp.ne.s32.totalorder %s293, %s309
    %p311 = scmp.eq.s32.totalorder %s23, 0
    %p312 = por %p310, %p311
    %p313 = scmp.le.s32.totalorder 1, %s17
    %p314 = scmp.lt.s32.totalorder %s17, 3
    %p315 = pnand %p313, %p314
    %p316 = pneg %p315
    // Predicated region
    $region9: #{tpu_custom_call.1} parent=5 // pred_check
      _
    $region10: #{tpu_custom_call.1} parent=5 // pred_check_branch
      %318 = sbr.rel (%p315) target = $region12
    $region11: #{tpu_custom_call.1} parent=5 // pred_region
      %s319 = ssub.s32 %s17, 1
      // Predicated region
      $region13: #{tpu_custom_call.1} parent=11 // pred_check
        %p320 = pneg %p78
      $region14: #{tpu_custom_call.1} parent=11 // pred_check_branch
        %322 = sbr.rel (%p320) target = $region16
      $region15: #{tpu_custom_call.1} parent=11 // pred_region
        _
      $region16: #{tpu_custom_call.1} parent=11 // pred_fallthru
        _
      // Predicated region
      $region17: #{tpu_custom_call.1} parent=11 // pred_check
        %p323 = pneg %p125
      $region18: #{tpu_custom_call.1} parent=11 // pred_check_branch
        %325 = sbr.rel (%p323) target = $region20
      $region19: #{tpu_custom_call.1} parent=11 // pred_region
        _
      $region20: #{tpu_custom_call.1} parent=11 // pred_fallthru
        _
      // Predicated region
      $region21: #{tpu_custom_call.1} parent=11 // pred_check
        %p326 = pneg %p146
      $region22: #{tpu_custom_call.1} parent=11 // pred_check_branch
        %328 = sbr.rel (%p326) target = $region24
      $region23: #{tpu_custom_call.1} parent=11 // pred_region
        _
      $region24: #{tpu_custom_call.1} parent=11 // pred_fallthru
        _
      // Predicated region
      $region25: #{tpu_custom_call.1} parent=11 // pred_check
        %p329 = pneg %p167
      $region26: #{tpu_custom_call.1} parent=11 // pred_check_branch
        %331 = sbr.rel (%p329) target = $region28
      $region27: #{tpu_custom_call.1} parent=11 // pred_region
        _
      $region28: #{tpu_custom_call.1} parent=11 // pred_fallthru
        _
      // Predicated region
      $region29: #{tpu_custom_call.1} parent=11 // pred_check
        %p332 = pneg %p214
      $region30: #{tpu_custom_call.1} parent=11 // pred_check_branch
        %334 = sbr.rel (%p332) target = $region32
      $region31: #{tpu_custom_call.1} parent=11 // pred_region
        _
      $region32: #{tpu_custom_call.1} parent=11 // pred_fallthru
        _
      // Predicated region
      $region33: #{tpu_custom_call.1} parent=11 // pred_check
        %p335 = pneg %p235
      $region34: #{tpu_custom_call.1} parent=11 // pred_check_branch
        %337 = sbr.rel (%p335) target = $region36
      $region35: #{tpu_custom_call.1} parent=11 // pred_region
        _
      $region36: #{tpu_custom_call.1} parent=11 // pred_fallthru
        _
      // Predicated region
      $region37: #{tpu_custom_call.1} parent=11 // pred_check
        %p338 = pneg %p256
      $region38: #{tpu_custom_call.1} parent=11 // pred_check_branch
        %340 = sbr.rel (%p338) target = $region40
      $region39: #{tpu_custom_call.1} parent=11 // pred_region
        _
      $region40: #{tpu_custom_call.1} parent=11 // pred_fallthru
        _
      // Predicated region
      $region41: #{tpu_custom_call.1} parent=11 // pred_check
        %p341 = pneg %p277
      $region42: #{tpu_custom_call.1} parent=11 // pred_check_branch
        %343 = sbr.rel (%p341) target = $region44
      $region43: #{tpu_custom_call.1} parent=11 // pred_region
        _
      $region44: #{tpu_custom_call.1} parent=11 // pred_fallthru
        _
    $region12: #{tpu_custom_call.1} parent=5 // pred_fallthru
      _
    %p344 = scmp.lt.s32.totalorder %s17, 2
    // Predicated region
    $region45: #{tpu_custom_call.1} parent=5 // pred_check
      %p345 = pneg %p344
    $region46: #{tpu_custom_call.1} parent=5 // pred_check_branch
      %347 = sbr.rel (%p345) target = $region48
    $region47: #{tpu_custom_call.1} parent=5 // pred_region
      // Predicated region
      $region49: #{tpu_custom_call.1} parent=47 // pred_check
        %p348 = pneg %p51
      $region50: #{tpu_custom_call.1} parent=47 // pred_check_branch
        %350 = sbr.rel (%p348) target = $region52
      $region51: #{tpu_custom_call.1} parent=47 // pred_region
        %p351 = scmp.lt.s32.totalorder %s24, 1
        %s352 = scalar_select %p351, %s24, 1
        %p353 = scmp.lt.s32.totalorder %s25, 0
        %s354 = scalar_select %p353, %s25, 0
        %s355 = sadd.s32 %s354, %s352
        %s356 = smul.addr %s355, 2
        %s357 = scalar_lea.vmem %s0, %s356
      $region52: #{tpu_custom_call.1} parent=47 // pred_fallthru
        _
      // Predicated region
      $region53: #{tpu_custom_call.1} parent=47 // pred_check
        %p358 = pneg %p98
      $region54: #{tpu_custom_call.1} parent=47 // pred_check_branch
        %360 = sbr.rel (%p358) target = $region56
      $region55: #{tpu_custom_call.1} parent=47 // pred_region
        %p361 = scmp.lt.s32.totalorder %s24, 1
        %s362 = scalar_select %p361, %s24, 1
        %s363 = smul.addr %s362, 4
        %s364 = smul.addr %s363, 8
        %s365 = scalar_lea.vmem %s2, %s364
      $region56: #{tpu_custom_call.1} parent=47 // pred_fallthru
        _
      // Predicated region
      $region57: #{tpu_custom_call.1} parent=47 // pred_check
        %p366 = pneg %p187
      $region58: #{tpu_custom_call.1} parent=47 // pred_check_branch
        %368 = sbr.rel (%p366) target = $region60
      $region59: #{tpu_custom_call.1} parent=47 // pred_region
        %p369 = scmp.lt.s32.totalorder %s24, 1
        %s370 = scalar_select %p369, %s24, 1
        %s371 = smul.addr %s370, 4
        %s372 = smul.addr %s371, 8
        %s373 = scalar_lea.vmem %s6, %s372
      $region60: #{tpu_custom_call.1} parent=47 // pred_fallthru
        _
    $region48: #{tpu_custom_call.1} parent=5 // pred_fallthru
      _
    %p374 = scmp.le.s32.totalorder 1, %s17
    %p375 = scmp.lt.s32.totalorder %s17, 3
    %p376 = pnand %p374, %p375
    %p377 = pneg %p376
    // Predicated region
    $region61: #{tpu_custom_call.1} parent=5 // pred_check
      _
    $region62: #{tpu_custom_call.1} parent=5 // pred_check_branch
      %379 = sbr.rel (%p376) target = $region64
    $region63: #{tpu_custom_call.1} parent=5 // pred_region
      %s380 = ssub.s32 %s17, 1
      %p381 = scmp.lt.s32.totalorder %s26, 1
      %s382 = scalar_select %p381, %s26, 1
      %p383 = scmp.lt.s32.totalorder %s27, 0
      %s384 = scalar_select %p383, %s27, 0
      %s385 = sadd.s32 %s384, %s382
      %s386 = smul.addr %s385, 2
      %s387 = scalar_lea.vmem %s0, %s386
      %p388 = pneg %p57
      %p389 = pneg %p54
      %p390 = pneg %p78
      %p391 = pneg %p75
      %p392 = scmp.lt.s32.totalorder %s26, 1
      %s393 = scalar_select %p392, %s26, 1
      %s394 = smul.addr %s393, 4
      %s395 = smul.addr %s394, 8
      %s396 = scalar_lea.vmem %s2, %s395
      %p397 = pneg %p104
      %p398 = pneg %p101
      %p399 = pneg %p125
      %p400 = pneg %p122
      %p401 = pneg %p146
      %p402 = pneg %p143
      %p403 = pneg %p167
      %p404 = pneg %p164
      %p405 = scmp.lt.s32.totalorder %s26, 1
      %s406 = scalar_select %p405, %s26, 1
      %s407 = smul.addr %s406, 4
      %s408 = smul.addr %s407, 8
      %s409 = scalar_lea.vmem %s6, %s408
      %p410 = pneg %p193
      %p411 = pneg %p190
      %p412 = pneg %p214
      %p413 = pneg %p211
      %p414 = pneg %p235
      %p415 = pneg %p232
      %p416 = pneg %p256
      %p417 = pneg %p253
      %p418 = pneg %p277
      %p419 = pneg %p274
      %p420 = pneg %p305
      %p421 = pneg %p302
      %p422 = scmp.lt.s32.totalorder %s26, 1
      %s423 = scalar_select %p422, %s26, 1
      %p424 = scmp.lt.s32.totalorder %s27, 0
      %s425 = scalar_select %p424, %s27, 0
      %s426 = sadd.s32 %s425, %s423
      %s427 = smul.addr %s426, 4
      %s428 = scalar_lea.vmem %s11, %s427
      %p429 = scmp.lt.s32.totalorder %s26, 1
      %s430 = scalar_select %p429, %s26, 1
      %p431 = scmp.lt.s32.totalorder %s27, 0
      %s432 = scalar_select %p431, %s27, 0
      %s433 = sadd.s32 %s432, %s430
      %s434 = smul.addr %s433, 2
      %s435 = scalar_lea.vmem %s0, %s434
      %p436 = scmp.lt.s32.totalorder %s26, 1
      %s437 = scalar_select %p436, %s26, 1
      %s438 = smul.addr %s437, 4
      %s439 = smul.addr %s438, 8
      %s440 = scalar_lea.vmem %s2, %s439
      %p441 = scmp.lt.s32.totalorder %s26, 1
      %s442 = scalar_select %p441, %s26, 1
      %s443 = smul.addr %s442, 4
      %s444 = smul.addr %s443, 8
      %s445 = scalar_lea.vmem %s6, %s444
      %p446 = scmp.lt.s32.totalorder %s26, 1
      %s447 = scalar_select %p446, %s26, 1
      %p448 = scmp.lt.s32.totalorder %s27, 0
      %s449 = scalar_select %p448, %s27, 0
      %s450 = sadd.s32 %s449, %s447
      %s451 = smul.addr %s450, 4
      %s452 = scalar_lea.vmem %s11, %s451
      %v453 = vld [vmem:[%s435] sm:$0x3]
      %v454 = vld [vmem:[%s1] sm:$0xff]
      %v455 = vld [vmem:[%s1 + $0x8] sm:$0xff]
      %v456 = vld [vmem:[%s1 + $0x10] sm:$0xff]
      %v457 = vld [vmem:[%s1 + $0x18] sm:$0xff]
      %459 = vset.pattern.permute.xlu0 0
      %460 = vperm.xlu0 %459, %v454
      %v461 = vpop.permute.xlu0 %460
      %464 = vset.pattern.permute.xlu0 0
      %465 = vperm.xlu0 %464, %v455
      %v466 = vpop.permute.xlu0 %465
      %469 = vset.pattern.permute.xlu0 0
      %470 = vperm.xlu0 %469, %v456
      %v471 = vpop.permute.xlu0 %470
      %474 = vset.pattern.permute.xlu0 0
      %475 = vperm.xlu0 %474, %v457
      %v476 = vpop.permute.xlu0 %475
      %v478 = vperm.slane %v453, 0
      %v479 = vmul.f32 %v461, %v478
      %v480 = vmul.f32 %v466, %v478
      %v481 = vmul.f32 %v471, %v478
      %v482 = vmul.f32 %v476, %v478
      %v483 = vld [vmem:[%s440] sm:$0xff]
      %v484 = vld [vmem:[%s440 + $0x8] sm:$0xff]
      %v485 = vld [vmem:[%s440 + $0x10] sm:$0xff]
      %v486 = vld [vmem:[%s440 + $0x18] sm:$0xff]
      %488 = vset.pattern.permute.xlu0 0
      %489 = vperm.xlu0 %488, %v483
      %v490 = vpop.permute.xlu0 %489
      %493 = vset.pattern.permute.xlu0 0
      %494 = vperm.xlu0 %493, %v484
      %v495 = vpop.permute.xlu0 %494
      %498 = vset.pattern.permute.xlu0 0
      %499 = vperm.xlu0 %498, %v485
      %v500 = vpop.permute.xlu0 %499
      %503 = vset.pattern.permute.xlu0 0
      %504 = vperm.xlu0 %503, %v486
      %v505 = vpop.permute.xlu0 %504
      %v507 = vadd.f32 %v479, %v490
      %v508 = vadd.f32 %v480, %v495
      %v509 = vadd.f32 %v481, %v500
      %v510 = vadd.f32 %v482, %v505
      %511 = vset.pattern.permute.xlu0 1
      %512 = vperm.xlu0 %511, %v454
      %v513 = vpop.permute.xlu0 %512
      %515 = vset.pattern.permute.xlu0 1
      %516 = vperm.xlu0 %515, %v455
      %v517 = vpop.permute.xlu0 %516
      %519 = vset.pattern.permute.xlu0 1
      %520 = vperm.xlu0 %519, %v456
      %v521 = vpop.permute.xlu0 %520
      %523 = vset.pattern.permute.xlu0 1
      %524 = vperm.xlu0 %523, %v457
      %v525 = vpop.permute.xlu0 %524
      %v527 = vperm.slane %v453, 1
      %v528 = vmul.f32 %v513, %v527
      %v529 = vmul.f32 %v517, %v527
      %v530 = vmul.f32 %v521, %v527
      %v531 = vmul.f32 %v525, %v527
      %v532 = vadd.f32 %v507, %v528
      %v533 = vadd.f32 %v508, %v529
      %v534 = vadd.f32 %v509, %v530
      %v535 = vadd.f32 %v510, %v531
      %v536 = vmax.f32 %v532, 0.0
      %v537 = vmax.f32 %v533, 0.0
      %v538 = vmax.f32 %v534, 0.0
      %v539 = vmax.f32 %v535, 0.0
      %v540 = vld [vmem:[%s4] sm:$0xff]
      %v541 = vld [vmem:[%s4 + $0x8] sm:$0xff]
      %v542 = vld [vmem:[%s4 + $0x10] sm:$0xff]
      %v543 = vld [vmem:[%s4 + $0x18] sm:$0xff]
      %v544 = vld [vmem:[%s3] sm:$0xff]
      %v545 = vld [vmem:[%s3 + $0x8] sm:$0xff]
      %v546 = vld [vmem:[%s3 + $0x10] sm:$0xff]
      %v547 = vld [vmem:[%s3 + $0x18] sm:$0xff]
      %549 = vset.pattern.permute.xlu0 0
      %550 = vperm.xlu0 %549, %v540
      %v551 = vpop.permute.xlu0 %550
      %554 = vset.pattern.permute.xlu0 0
      %555 = vperm.xlu0 %554, %v541
      %v556 = vpop.permute.xlu0 %555
      %559 = vset.pattern.permute.xlu0 0
      %560 = vperm.xlu0 %559, %v542
      %v561 = vpop.permute.xlu0 %560
      %564 = vset.pattern.permute.xlu0 0
      %565 = vperm.xlu0 %564, %v543
      %v566 = vpop.permute.xlu0 %565
      %vm568 = vcmask 261120
      %v570 = vsel %vm568, %v544, 0
      %v573 = vsel %vm568, %v545, 0
      %v576 = vsel %vm568, %v546, 0
      %v579 = vsel %vm568, %v547, 0
      %581 = vmatpush.msra.mxu0 0.0
      %582 = vmatpush.msra.mxu0 0.0
      %583 = vmatpush.msra.mxu0 0.0
      %584 = vmatpush.msra.mxu0 0.0
      %585 = vmatpush.msra.mxu0 0.0
      %586 = vmatpush.msra.mxu0 0.0
      %587 = vmatpush.msra.mxu0 0.0
      %588 = vmatpush.msra.mxu0 0.0
      %589 = vmatpush.msra.mxu0 0.0
      %590 = vmatpush.msra.mxu0 0.0
      %591 = vmatpush.msra.mxu0 0.0
      %592 = vmatpush.msra.mxu0 0.0
      %593 = vmatpush.msra.mxu0 %v539
      %594 = vmatpush.msra.mxu0 %v538
      %595 = vmatpush.msra.mxu0 %v537
      %596 = vmatpush.msra.mxu0 %v536
      %597 = vmatmul.f32.gmra.mxu0 %v570
      %v598 = vpop.f32.mrf.mxu0
      %v599 = vadd.f32 %v551, %v598
      %600 = vmatmul.f32.gmra.mxu0 %v573
      %v601 = vpop.f32.mrf.mxu0
      %v602 = vadd.f32 %v556, %v601
      %603 = vmatmul.f32.gmra.mxu0 %v576
      %v604 = vpop.f32.mrf.mxu0
      %v605 = vadd.f32 %v561, %v604
      %606 = vmatmul.f32.gmra.mxu0 %v579
      %v607 = vpop.f32.mrf.mxu0
      %v608 = vadd.f32 %v566, %v607
      %609 = vdwg.mxu0
      %v610 = vmax.f32 %v599, 0.0
      %v611 = vmax.f32 %v602, 0.0
      %v612 = vmax.f32 %v605, 0.0
      %v613 = vmax.f32 %v608, 0.0
      %v614 = vld [vmem:[%s445] sm:$0xff]
      %v615 = vld [vmem:[%s445 + $0x8] sm:$0xff]
      %v616 = vld [vmem:[%s445 + $0x10] sm:$0xff]
      %v617 = vld [vmem:[%s445 + $0x18] sm:$0xff]
      %v618 = vld [vmem:[%s5] sm:$0xff]
      %v619 = vld [vmem:[%s5 + $0x8] sm:$0xff]
      %v620 = vld [vmem:[%s5 + $0x10] sm:$0xff]
      %v621 = vld [vmem:[%s5 + $0x18] sm:$0xff]
      %623 = vset.pattern.permute.xlu0 0
      %624 = vperm.xlu0 %623, %v614
      %v625 = vpop.permute.xlu0 %624
      %628 = vset.pattern.permute.xlu0 0
      %629 = vperm.xlu0 %628, %v615
      %v630 = vpop.permute.xlu0 %629
      %633 = vset.pattern.permute.xlu0 0
      %634 = vperm.xlu0 %633, %v616
      %v635 = vpop.permute.xlu0 %634
      %638 = vset.pattern.permute.xlu0 0
      %639 = vperm.xlu0 %638, %v617
      %v640 = vpop.permute.xlu0 %639
      %v643 = vsel %vm568, %v618, 0
      %v646 = vsel %vm568, %v619, 0
      %v649 = vsel %vm568, %v620, 0
      %v652 = vsel %vm568, %v621, 0
      %654 = vmatpush.msra.mxu0 0.0
      %655 = vmatpush.msra.mxu0 0.0
      %656 = vmatpush.msra.mxu0 0.0
      %657 = vmatpush.msra.mxu0 0.0
      %658 = vmatpush.msra.mxu0 0.0
      %659 = vmatpush.msra.mxu0 0.0
      %660 = vmatpush.msra.mxu0 0.0
      %661 = vmatpush.msra.mxu0 0.0
      %662 = vmatpush.msra.mxu0 0.0
      %663 = vmatpush.msra.mxu0 0.0
      %664 = vmatpush.msra.mxu0 0.0
      %665 = vmatpush.msra.mxu0 0.0
      %666 = vmatpush.msra.mxu0 %v613
      %667 = vmatpush.msra.mxu0 %v612
      %668 = vmatpush.msra.mxu0 %v611
      %669 = vmatpush.msra.mxu0 %v610
      %670 = vmatmul.f32.gmra.mxu0 %v643
      %v671 = vpop.f32.mrf.mxu0
      %v672 = vadd.f32 %v625, %v671
      %673 = vmatmul.f32.gmra.mxu0 %v646
      %v674 = vpop.f32.mrf.mxu0
      %v675 = vadd.f32 %v630, %v674
      %676 = vmatmul.f32.gmra.mxu0 %v649
      %v677 = vpop.f32.mrf.mxu0
      %v678 = vadd.f32 %v635, %v677
      %679 = vmatmul.f32.gmra.mxu0 %v652
      %v680 = vpop.f32.mrf.mxu0
      %v681 = vadd.f32 %v640, %v680
      %682 = vdwg.mxu0
      %v683 = vmax.f32 %v672, 0.0
      %v684 = vmax.f32 %v675, 0.0
      %v685 = vmax.f32 %v678, 0.0
      %v686 = vmax.f32 %v681, 0.0
      %v687 = vld [vmem:[%s8] sm:$0xff]
      %v688 = vld [vmem:[%s8 + $0x8] sm:$0xff]
      %v689 = vld [vmem:[%s8 + $0x10] sm:$0xff]
      %v690 = vld [vmem:[%s8 + $0x18] sm:$0xff]
      %v691 = vld [vmem:[%s7] sm:$0xff]
      %v692 = vld [vmem:[%s7 + $0x8] sm:$0xff]
      %v693 = vld [vmem:[%s7 + $0x10] sm:$0xff]
      %v694 = vld [vmem:[%s7 + $0x18] sm:$0xff]
      %696 = vset.pattern.permute.xlu0 0
      %697 = vperm.xlu0 %696, %v687
      %v698 = vpop.permute.xlu0 %697
      %701 = vset.pattern.permute.xlu0 0
      %702 = vperm.xlu0 %701, %v688
      %v703 = vpop.permute.xlu0 %702
      %706 = vset.pattern.permute.xlu0 0
      %707 = vperm.xlu0 %706, %v689
      %v708 = vpop.permute.xlu0 %707
      %711 = vset.pattern.permute.xlu0 0
      %712 = vperm.xlu0 %711, %v690
      %v713 = vpop.permute.xlu0 %712
      %v716 = vsel %vm568, %v691, 0
      %v719 = vsel %vm568, %v692, 0
      %v722 = vsel %vm568, %v693, 0
      %v725 = vsel %vm568, %v694, 0
      %727 = vmatpush.msra.mxu0 0.0
      %728 = vmatpush.msra.mxu0 0.0
      %729 = vmatpush.msra.mxu0 0.0
      %730 = vmatpush.msra.mxu0 0.0
      %731 = vmatpush.msra.mxu0 0.0
      %732 = vmatpush.msra.mxu0 0.0
      %733 = vmatpush.msra.mxu0 0.0
      %734 = vmatpush.msra.mxu0 0.0
      %735 = vmatpush.msra.mxu0 0.0
      %736 = vmatpush.msra.mxu0 0.0
      %737 = vmatpush.msra.mxu0 0.0
      %738 = vmatpush.msra.mxu0 0.0
      %739 = vmatpush.msra.mxu0 %v686
      %740 = vmatpush.msra.mxu0 %v685
      %741 = vmatpush.msra.mxu0 %v684
      %742 = vmatpush.msra.mxu0 %v683
      %743 = vmatmul.f32.gmra.mxu0 %v716
      %v744 = vpop.f32.mrf.mxu0
      %v745 = vadd.f32 %v698, %v744
      %746 = vmatmul.f32.gmra.mxu0 %v719
      %v747 = vpop.f32.mrf.mxu0
      %v748 = vadd.f32 %v703, %v747
      %749 = vmatmul.f32.gmra.mxu0 %v722
      %v750 = vpop.f32.mrf.mxu0
      %v751 = vadd.f32 %v708, %v750
      %752 = vmatmul.f32.gmra.mxu0 %v725
      %v753 = vpop.f32.mrf.mxu0
      %v754 = vadd.f32 %v713, %v753
      %755 = vdwg.mxu0
      %v756 = vmax.f32 %v745, 0.0
      %v757 = vmax.f32 %v748, 0.0
      %v758 = vmax.f32 %v751, 0.0
      %v759 = vmax.f32 %v754, 0.0
      %v760 = vld [vmem:[%s10] sm:$0x7]
      %v761 = vld [vmem:[%s9] sm:$0x7]
      %763 = vset.pattern.permute.xlu0 0
      %764 = vperm.xlu0 %763, %v760
      %v765 = vpop.permute.xlu0 %764
      %v768 = vsel %vm568, %v761, 0
      %770 = vmatpush.msra.mxu0 0.0
      %771 = vmatpush.msra.mxu0 0.0
      %772 = vmatpush.msra.mxu0 0.0
      %773 = vmatpush.msra.mxu0 0.0
      %774 = vmatpush.msra.mxu0 0.0
      %775 = vmatpush.msra.mxu0 0.0
      %776 = vmatpush.msra.mxu0 0.0
      %777 = vmatpush.msra.mxu0 0.0
      %778 = vmatpush.msra.mxu0 0.0
      %779 = vmatpush.msra.mxu0 0.0
      %780 = vmatpush.msra.mxu0 0.0
      %781 = vmatpush.msra.mxu0 0.0
      %782 = vmatpush.msra.mxu0 %v759
      %783 = vmatpush.msra.mxu0 %v758
      %784 = vmatpush.msra.mxu0 %v757
      %785 = vmatpush.msra.mxu0 %v756
      %786 = vmatmul.f32.gmra.mxu0 %v768
      %v787 = vpop.f32.mrf.mxu0
      %v788 = vadd.f32 %v765, %v787
      %789 = vdwg.mxu0
      %790 = vst [vmem:[%s452] sm:$0x7] %v788
      %p791 = scmp.lt.s32.totalorder %s26, 1
      %s792 = scalar_select %p791, %s26, 1
      %p793 = scmp.lt.s32.totalorder %s27, 0
      %s794 = scalar_select %p793, %s27, 0
      %s795 = sadd.s32 %s794, %s792
      %s796 = smul.addr %s795, 4
      %s797 = scalar_lea.vmem %s11, %s796
      // Predicated region
      $region65: #{tpu_custom_call.1} parent=63 // pred_check
        %p798 = pneg %p302
      $region66: #{tpu_custom_call.1} parent=63 // pred_check_branch
        %800 = sbr.rel (%p798) target = $region68
      $region67: #{tpu_custom_call.1} parent=63 // pred_region
        _
      $region68: #{tpu_custom_call.1} parent=63 // pred_fallthru
        _
    $region64: #{tpu_custom_call.1} parent=5 // pred_fallthru
      _
    %p801 = scmp.le.s32.totalorder 2, %s17
    // Predicated region
    $region69: #{tpu_custom_call.1} parent=5 // pred_check
      %p802 = pneg %p801
    $region70: #{tpu_custom_call.1} parent=5 // pred_check_branch
      %804 = sbr.rel (%p802) target = $region72
    $region71: #{tpu_custom_call.1} parent=5 // pred_region
      %s805 = ssub.s32 %s17, 2
      // Predicated region
      $region73: #{tpu_custom_call.1} parent=71 // pred_check
        %p806 = pneg %p308
      $region74: #{tpu_custom_call.1} parent=71 // pred_check_branch
        %808 = sbr.rel (%p806) target = $region76
      $region75: #{tpu_custom_call.1} parent=71 // pred_region
        %p809 = scmp.lt.s32.totalorder %s28, 1
        %s810 = scalar_select %p809, %s28, 1
        %p811 = scmp.lt.s32.totalorder %s29, 0
        %s812 = scalar_select %p811, %s29, 0
        %s813 = sadd.s32 %s812, %s810
        %s814 = smul.addr %s813, 4
        %s815 = scalar_lea.vmem %s11, %s814
      $region76: #{tpu_custom_call.1} parent=71 // pred_fallthru
        _
    $region72: #{tpu_custom_call.1} parent=5 // pred_fallthru
      _
  $region6: #{tpu_custom_call.1} parent=0 // loop_footer
    %s21 = sadd.s32 1, %s17
  $region7: #{tpu_custom_call.1} parent=0 // loop_footer_branch
    %16 = sbr.rel target = $region3
  $region8: #{tpu_custom_call.1} parent=0 // loop_exit
    _

</llo_original>
